<compile_context>
chip_gen: v5e
topology: v5e:2x2
jax: 0.10.0
libtpu: 0.0.40
codegen_flags: <defaults>
</compile_context>

<pallas_src>
import jax
import jax.numpy as jnp
from jax.experimental import pallas as pl
from jax.experimental.pallas import tpu as pltpu

# ----- configuration implied by the PyTorch module defaults -----
NUM_CAPSULES = 3       # PrimaryCapsules(num_capsules=3)
NUM_OUT_CAPS = 2       # RoutingMechanism(num_output_capsules=2)  (== num_class)
DATA_IN = 8            # RoutingMechanism(data_in=8)
DATA_OUT = 4           # RoutingMechanism(data_out=4)
NUM_ITERATIONS = 3     # RoutingMechanism(num_iterations=3)
ENC_OUT_CH = NUM_CAPSULES * DATA_IN   # 24 encoder output channels
KH = KW = 3


def _round_up(x, m):
    return ((x + m - 1) // m) * m


# ---------------------------------------------------------------------------
# Kernel 1: encoder conv (im2col matmul, bf16 in / f32 acc) + bias + ReLU,
#           fused with global-average-pool over the spatial axis.
# Grid: (batch, spatial_tiles).  Output block (1, 24) is revisited across the
# "arbitrary" spatial axis and acts as the GAP accumulator (stays in VMEM).
# ---------------------------------------------------------------------------
def _make_conv_gap_kernel(*, ts, hw, padded):
    inv_hw = 1.0 / float(hw)

    def kernel(a_ref, w_ref, b_ref, o_ref):
        s = pl.program_id(1)

        @pl.when(s == 0)
        def _():
            o_ref[...] = jnp.zeros_like(o_ref)

        y = jnp.dot(a_ref[...], w_ref[...],
                    preferred_element_type=jnp.float32)          # (ts, 24) f32
        y = jnp.maximum(y + b_ref[...], 0.0)                      # bias + ReLU
        if padded:
            # mask padded spatial rows so relu(bias) garbage never enters GAP
            row = s * ts + jax.lax.broadcasted_iota(jnp.int32, y.shape, 0)
            y = jnp.where(row < hw, y, 0.0)
        o_ref[...] += jnp.sum(y, axis=0, keepdims=True)           # partial GAP sum

        @pl.when(s == pl.num_programs(1) - 1)
        def _():
            o_ref[...] = o_ref[...] * inv_hw                      # sum -> mean

    return kernel


def conv_relu_gap(patches, w_mat, bias, *, hw, ts):
    """patches: (B, HWp, K) bf16; w_mat: (K, 24) bf16; bias: (1, 24) f32."""
    B, HWp, K = patches.shape
    N = w_mat.shape[1]
    S = HWp // ts
    kernel = _make_conv_gap_kernel(ts=ts, hw=hw, padded=(HWp != hw))
    out = pl.pallas_call(
        kernel,
        out_shape=jax.ShapeDtypeStruct((B, 1, N), jnp.float32),
        grid_spec=pltpu.PrefetchScalarGridSpec(
            num_scalar_prefetch=0,
            grid=(B, S),
            in_specs=[
                pl.BlockSpec((None, ts, K), lambda b, s: (b, s, 0)),
                pl.BlockSpec((K, N), lambda b, s: (0, 0)),
                pl.BlockSpec((1, N), lambda b, s: (0, 0)),
            ],
            out_specs=pl.BlockSpec((None, 1, N), lambda b, s: (b, 0, 0)),
        ),
        compiler_params=pltpu.CompilerParams(
            dimension_semantics=("parallel", "arbitrary")),
    )(patches, w_mat, bias)
    return out.reshape(B, N)                                      # (B, 24) pooled


# ---------------------------------------------------------------------------
# Kernel 2: primary capsules + dynamic routing, batch-tiled with batch on the
# lane axis.  One grid step handles BT (=128) batch elements at once.
#   pooled_ref : (3, 8, BT)        [capsule, data_in, batch-lane]
#   pcw_ref    : (3, 8, 8, 1)      per-capsule projection (trailing 1 = lane bcast)
#   pcb_ref    : (3, 8, 1)
#   rw_ref     : (2, 3, 4, 8, 1)   routing weights (noise already added)
#   mask_ref   : (2, 3, 4, BT)     prior dropout mask
#   z_ref      : (2, 4, BT)        lane-dense output slab
# ---------------------------------------------------------------------------
def _squash(t, axis):
    sq = jnp.sum(t * t, axis=axis, keepdims=True)
    # keeps the original rsqrt(sq + 1e-8) formulation
    return (sq / (1.0 + sq)) * t * jax.lax.rsqrt(sq + 1e-8)


def _caps_routing_kernel(pooled_ref, pcw_ref, pcb_ref, rw_ref, mask_ref, z_ref):
    pooled = pooled_ref[...]                                      # (3, 8, BT)
    # primary capsules: u[c, o, b] = sum_i pcw[c, o, i] * pooled[c, i, b] + pcb[c, o]
    u = jnp.sum(pcw_ref[...] * pooled[:, None, :, :], axis=2) + pcb_ref[...]  # (3,8,BT)
    u = _squash(u, axis=1)

    # priors[o, c, j, b] = sum_i rw[o, c, j, i] * u[c, i, b]  (both output caps at once)
    priors = jnp.sum(rw_ref[...] * u[None, :, None, :, :], axis=3)  # (2,3,4,BT)
    priors = priors * mask_ref[...]                               # prior dropout
    # TODO(synk): dropout mask intentionally NOT rescaled by 1/(1-p),
    # matching the Capsule-Forensics reference behaviour.

    # iteration 0: logits are all-zero -> softmax is exactly uniform; skip it.
    s = jnp.sum(priors, axis=1, keepdims=True) * (1.0 / NUM_CAPSULES)  # (2,1,4,BT)
    v = _squash(s, axis=2)                                        # squash over data_out
    logits = priors * v                                           # zeros + priors*v

    for it in range(1, NUM_ITERATIONS):
        # softmax over the input-capsule axis (axis 1 here)
        m = jnp.max(logits, axis=1, keepdims=True)
        e = jnp.exp(logits - m)
        probs = e / jnp.sum(e, axis=1, keepdims=True)             # (2,3,4,BT)
        s = jnp.sum(probs * priors, axis=1, keepdims=True)        # (2,1,4,BT)
        v = _squash(s, axis=2)
        if it != NUM_ITERATIONS - 1:
            logits = logits + priors * v                          # routing update

    z_ref[...] = v[:, 0, :, :]                                    # (2, 4, BT) lane-dense


def capsule_routing(pooled_cib, pc_wT, pc_b, route_w, drop_mask, *, bt=128):
    Bp = pooled_cib.shape[-1]
    assert Bp % bt == 0
    return pl.pallas_call(
        _caps_routing_kernel,
        out_shape=jax.ShapeDtypeStruct((NUM_OUT_CAPS, DATA_OUT, Bp), jnp.float32),
        grid_spec=pltpu.PrefetchScalarGridSpec(
            num_scalar_prefetch=0,
            grid=(Bp // bt,),
            in_specs=[
                pl.BlockSpec((NUM_CAPSULES, DATA_IN, bt), lambda i: (0, 0, i)),
                pl.BlockSpec((NUM_CAPSULES, DATA_IN, DATA_IN, 1),
                             lambda i: (0, 0, 0, 0)),
                pl.BlockSpec((NUM_CAPSULES, DATA_IN, 1), lambda i: (0, 0, 0)),
                pl.BlockSpec((NUM_OUT_CAPS, NUM_CAPSULES, DATA_OUT, DATA_IN, 1),
                             lambda i: (0, 0, 0, 0, 0)),
                pl.BlockSpec((NUM_OUT_CAPS, NUM_CAPSULES, DATA_OUT, bt),
                             lambda i: (0, 0, 0, i)),
            ],
            out_specs=pl.BlockSpec((NUM_OUT_CAPS, DATA_OUT, bt), lambda i: (0, 0, i)),
        ),
        compiler_params=pltpu.CompilerParams(dimension_semantics=("parallel",)),
    )(pooled_cib, pc_wT, pc_b, route_w, drop_mask)


# ---------------------------------------------------------------------------
# Glue (plain JAX): im2col, parameter setup, noise/dropout sampling
# ---------------------------------------------------------------------------
def im2col_3x3(x):
    """x: (B, C, H, W), stride 1, padding 1 -> (B, H*W, C*9)."""
    B, C, H, W = x.shape
    xp = jnp.pad(x, ((0, 0), (0, 0), (1, 1), (1, 1)))
    cols = [xp[:, :, dh:dh + H, dw:dw + W] for dh in range(KH) for dw in range(KW)]
    cols = jnp.stack(cols, axis=2)                 # (B, C, 9, H, W)
    cols = cols.reshape(B, C * KH * KW, H, W)      # flat index = c*9 + kh*3 + kw
    cols = cols.transpose(0, 2, 3, 1)              # (B, H, W, C*9)
    return cols.reshape(B, H * W, C * KH * KW)


def init_params(key, in_channels):
    k1, k2, k3, k4, k5 = jax.random.split(key, 5)
    return {
        # TODO(synk): Encoder(d_args) source unavailable; a single 3x3 conv +
        # ReLU producing 24 channels stands in for the feature extractor.
        "conv_w": 0.1 * jax.random.normal(k1, (ENC_OUT_CH, in_channels, KH, KW), jnp.float32),
        "conv_b": 0.01 * jax.random.normal(k2, (ENC_OUT_CH,), jnp.float32),
        # per-capsule projection, stored transposed: (caps, out_dim, in_dim)
        "pc_wT": 0.1 * jax.random.normal(k3, (NUM_CAPSULES, DATA_IN, DATA_IN), jnp.float32),
        "pc_b": 0.01 * jax.random.normal(k4, (NUM_CAPSULES, DATA_IN), jnp.float32),
        # routing weights: (num_out, num_in, data_out, data_in), ~N(0, 0.01)
        "route_w": 0.01 * jax.random.normal(
            k5, (NUM_OUT_CAPS, NUM_CAPSULES, DATA_OUT, DATA_IN), jnp.float32),
    }


def _sample_noise_mask(key, route_w, B, random, dropout, random_size):
    k_noise, k_drop = jax.random.split(key)
    rw = route_w
    if random:
        rw = rw + random_size * jax.random.normal(k_noise, rw.shape, jnp.float32)
    if dropout > 0.0:
        mask = jax.random.bernoulli(
            k_drop, 1.0 - dropout,
            (NUM_OUT_CAPS, NUM_CAPSULES, DATA_OUT, B)).astype(jnp.float32)
    else:
        mask = jnp.ones((NUM_OUT_CAPS, NUM_CAPSULES, DATA_OUT, B), jnp.float32)
    return rw, mask


def capsule_net_forward(params, x, key, random=True, dropout=0.05,
                        random_size=0.01, bt=128):
    B, C, H, W = x.shape
    HW = H * W

    # --- Encoder conv3x3 + ReLU + GAP, fused in one Pallas kernel (bf16 MXU) ---
    # TODO(synk): im2col is still materialized host-side (9x read expansion);
    # a fully in-kernel im2col from a padded NHWC tile would remove it.
    patches = im2col_3x3(x.astype(jnp.float32))                    # (B, HW, C*9)
    ts = min(2048, _round_up(HW, 128))                             # spatial row tile
    HWp = _round_up(HW, ts)
    if HWp != HW:
        patches = jnp.pad(patches, ((0, 0), (0, HWp - HW), (0, 0)))
    patches = patches.astype(jnp.bfloat16)
    w_mat = params["conv_w"].reshape(ENC_OUT_CH, -1).T.astype(jnp.bfloat16)  # (C*9, 24)
    bias = params["conv_b"].reshape(1, ENC_OUT_CH).astype(jnp.float32)
    pooled = conv_relu_gap(patches, w_mat, bias, hw=HW, ts=ts)     # (B, 24) f32

    # batch-on-lanes layout for the routing kernel
    pooled_cib = pooled.reshape(B, NUM_CAPSULES, DATA_IN).transpose(1, 2, 0)  # (3,8,B)
    Bp = _round_up(B, bt)
    if Bp != B:
        pooled_cib = jnp.pad(pooled_cib, ((0, 0), (0, 0), (0, Bp - B)))

    # routing-weight noise + prior dropout mask (deterministic RNG)
    rw, mask = _sample_noise_mask(key, params["route_w"], B,
                                  random, dropout, random_size)
    if Bp != B:
        mask = jnp.pad(mask, ((0, 0), (0, 0), (0, 0), (0, Bp - B)))

    # trailing singleton dims so the kernel lane-broadcasts the tiny weights
    pc_wT_r = params["pc_wT"].reshape(NUM_CAPSULES, DATA_IN, DATA_IN, 1)
    pc_b_r = params["pc_b"].reshape(NUM_CAPSULES, DATA_IN, 1)
    rw_r = rw.reshape(NUM_OUT_CAPS, NUM_CAPSULES, DATA_OUT, DATA_IN, 1)

    z_flat = capsule_routing(pooled_cib, pc_wT_r, pc_b_r, rw_r, mask, bt=bt)  # (2,4,Bp)
    z = jnp.transpose(z_flat[:, :, :B], (2, 1, 0))                 # (B, DATA_OUT, 2)
    # class_ = z.detach().mean(dim=1)
    class_ = jnp.mean(jax.lax.stop_gradient(z), axis=1)            # (B, 2)
    return z, class_


# ---------------------------------------------------------------------------
# Pure-JAX reference (same bf16 conv inputs, same RNG) for a correctness check
# ---------------------------------------------------------------------------
def capsule_net_reference(params, x, key, random=True, dropout=0.05, random_size=0.01):
    B, C, H, W = x.shape
    patches = im2col_3x3(x.astype(jnp.float32)).astype(jnp.bfloat16)       # (B, HW, K)
    w_mat = params["conv_w"].reshape(ENC_OUT_CH, -1).T.astype(jnp.bfloat16)
    bias = params["conv_b"].reshape(1, 1, ENC_OUT_CH)
    conv = jnp.dot(patches, w_mat, preferred_element_type=jnp.float32) + bias
    conv = jnp.maximum(conv, 0.0)
    pooled = jnp.mean(conv, axis=1).reshape(B, NUM_CAPSULES, DATA_IN)      # (B, 3, 8)

    u = jnp.einsum('coi,bci->bco', params["pc_wT"], pooled) + params["pc_b"][None]
    sq = jnp.sum(u * u, axis=-1, keepdims=True)
    u = (sq / (1.0 + sq)) * u * jax.lax.rsqrt(sq + 1e-8)

    rw, mask = _sample_noise_mask(key, params["route_w"], B,
                                  random, dropout, random_size)
    mask_b = jnp.transpose(mask, (3, 0, 1, 2))                             # (B, 2, 3, 4)

    priors = jnp.einsum('ocji,bci->bocj', rw, u) * mask_b                  # (B, 2, 3, 4)
    logits = jnp.zeros_like(priors)
    v = None
    for it in range(NUM_ITERATIONS):
        m = jnp.max(logits, axis=2, keepdims=True)
        e = jnp.exp(logits - m)
        probs = e / jnp.sum(e, axis=2, keepdims=True)
        s = jnp.sum(probs * priors, axis=2, keepdims=True)                 # (B, 2, 1, 4)
        sqv = jnp.sum(s * s, axis=-1, keepdims=True)
        v = (sqv / (1.0 + sqv)) * s * jax.lax.rsqrt(sqv + 1e-8)
        if it != NUM_ITERATIONS - 1:
            logits = logits + priors * v
    z = jnp.transpose(v[:, :, 0, :], (0, 2, 1))                            # (B, 4, 2)
    class_ = jnp.mean(jax.lax.stop_gradient(z), axis=1)
    return z, class_


if __name__ == "__main__":
    key = jax.random.PRNGKey(0)
    k_params, k_x, k_fwd = jax.random.split(key, 3)

    B, C, H, W = 2, 4, 16, 16
    params = init_params(k_params, in_channels=C)
    x = jax.random.normal(k_x, (B, C, H, W), jnp.float32)   # NCHW like PyTorch

    z, class_ = capsule_net_forward(params, x, k_fwd,
                                    random=True, dropout=0.05, random_size=0.01)
    jax.block_until_ready((z, class_))

    assert z.shape == (B, DATA_OUT, NUM_OUT_CAPS)
    assert class_.shape == (B, NUM_OUT_CAPS)
    assert bool(jnp.all(jnp.isfinite(z))) and bool(jnp.all(jnp.isfinite(class_)))

    z_ref, class_ref = capsule_net_reference(params, x, k_fwd,
                                             random=True, dropout=0.05,
                                             random_size=0.01)
    jax.block_until_ready((z_ref, class_ref))
    assert bool(jnp.allclose(z, z_ref, atol=2e-3, rtol=2e-3))
    assert bool(jnp.allclose(class_, class_ref, atol=2e-3, rtol=2e-3))

    print("KERNEL_OK")
</pallas_src>

<mosaic_0001>
module attributes {stable_mosaic.version = 11 : i64} {
  func.func @kernel(%arg0: i32, %arg1: i32, %arg2: memref<1x256x36xbf16, #tpu.memory_space<vmem>>, %arg3: memref<36x24xbf16, #tpu.memory_space<vmem>>, %arg4: memref<1x24xf32, #tpu.memory_space<vmem>>, %arg5: memref<1x1x24xf32, #tpu.memory_space<vmem>>) attributes {dimension_semantics = [#tpu.dimension_semantics<parallel>, #tpu.dimension_semantics<arbitrary>], iteration_bounds = array<i64: 2, 1>, scalar_prefetch = 0 : i64, scratch_operands = 0 : i64, tpu.core_type = #tpu.core_type<tc>, window_params = [{transform_indices = @transform_0, window_bounds = array<i64: 1, 256, 36>}, {pipeline_mode = #tpu.pipeline_mode<synchronous>, transform_indices = @transform_1, window_bounds = array<i64: 36, 24>}, {pipeline_mode = #tpu.pipeline_mode<synchronous>, transform_indices = @transform_2, window_bounds = array<i64: 1, 24>}, {transform_indices = @transform_3, window_bounds = array<i64: 1, 1, 24>}]} {
    %c0_i32 = arith.constant 0 : i32
    %0 = arith.cmpi eq, %arg1, %c0_i32 : i32
    %1 = arith.extui %0 : i1 to i32
    %c0_i32_0 = arith.constant 0 : i32
    %2 = arith.cmpi ne, %1, %c0_i32_0 : i32
    scf.if %2 {
      %cst_17 = arith.constant 0.000000e+00 : f32
      %23 = vector.broadcast %cst_17 : f32 to vector<1x24xf32>
      %c0_18 = arith.constant 0 : index
      %c0_19 = arith.constant 0 : index
      %c0_20 = arith.constant 0 : index
      %24 = vector.load %arg5[%c0_18, %c0_19, %c0_20] : memref<1x1x24xf32, #tpu.memory_space<vmem>>, vector<1x1x24xf32>
      %25 = vector.shape_cast %24 : vector<1x1x24xf32> to vector<1x24xf32>
      %26 = vector.shape_cast %23 : vector<1x24xf32> to vector<1x1x24xf32>
      tpu.vector_store %arg5[%c0_18, %c0_19, %c0_20], %26 {strides = array<i32>} : memref<1x1x24xf32, #tpu.memory_space<vmem>>, vector<1x1x24xf32>,
    } else {
    }
    %c0 = arith.constant 0 : index
    %c0_1 = arith.constant 0 : index
    %c0_2 = arith.constant 0 : index
    %3 = vector.load %arg2[%c0, %c0_1, %c0_2] : memref<1x256x36xbf16, #tpu.memory_space<vmem>>, vector<1x256x36xbf16>
    %4 = vector.shape_cast %3 : vector<1x256x36xbf16> to vector<256x36xbf16>
    %c0_3 = arith.constant 0 : index
    %c0_4 = arith.constant 0 : index
    %5 = vector.load %arg3[%c0_3, %c0_4] : memref<36x24xbf16, #tpu.memory_space<vmem>>, vector<36x24xbf16>
    %cst = arith.constant dense<0.000000e+00> : vector<256x24xf32>
    %6 = tpu.matmul %4, %5, %cst {dimension_numbers = #tpu.dot_dimension_numbers<[1], [0], [0], [1], [0, 0, 1, 1], [], []>} : vector<256x36xbf16>, vector<36x24xbf16>, vector<256x24xf32> -> vector<256x24xf32>
    %c0_5 = arith.constant 0 : index
    %c0_6 = arith.constant 0 : index
    %7 = vector.load %arg4[%c0_5, %c0_6] : memref<1x24xf32, #tpu.memory_space<vmem>>, vector<1x24xf32>
    %8 = vector.broadcast %7 : vector<1x24xf32> to vector<256x24xf32>
    %9 = arith.addf %6, %8 : vector<256x24xf32>
    %cst_7 = arith.constant 0.000000e+00 : f32
    %10 = vector.broadcast %cst_7 : f32 to vector<256x24xf32>
    %11 = arith.maximumf %9, %10 : vector<256x24xf32>
    %c0_8 = arith.constant 0 : index
    %c0_9 = arith.constant 0 : index
    %c0_10 = arith.constant 0 : index
    %12 = vector.load %arg5[%c0_8, %c0_9, %c0_10] : memref<1x1x24xf32, #tpu.memory_space<vmem>>, vector<1x1x24xf32>
    %13 = vector.shape_cast %12 : vector<1x1x24xf32> to vector<1x24xf32>
    %cst_11 = arith.constant dense<0.000000e+00> : vector<24xf32>
    %14 = vector.multi_reduction <add>, %11, %cst_11 [0] : vector<256x24xf32> to vector<24xf32>
    %15 = vector.shape_cast %14 : vector<24xf32> to vector<1x24xf32>
    %16 = arith.addf %13, %15 : vector<1x24xf32>
    %c0_12 = arith.constant 0 : index
    %c0_13 = arith.constant 0 : index
    %c0_14 = arith.constant 0 : index
    %17 = vector.load %arg5[%c0_12, %c0_13, %c0_14] : memref<1x1x24xf32, #tpu.memory_space<vmem>>, vector<1x1x24xf32>
    %18 = vector.shape_cast %17 : vector<1x1x24xf32> to vector<1x24xf32>
    %19 = vector.shape_cast %16 : vector<1x24xf32> to vector<1x1x24xf32>
    tpu.vector_store %arg5[%c0_12, %c0_13, %c0_14], %19 {strides = array<i32>} : memref<1x1x24xf32, #tpu.memory_space<vmem>>, vector<1x1x24xf32>,
    %c0_i32_15 = arith.constant 0 : i32
    %20 = arith.cmpi eq, %arg1, %c0_i32_15 : i32
    %21 = arith.extui %20 : i1 to i32
    %c0_i32_16 = arith.constant 0 : i32
    %22 = arith.cmpi ne, %21, %c0_i32_16 : i32
    scf.if %22 {
      %c0_17 = arith.constant 0 : index
      %c0_18 = arith.constant 0 : index
      %c0_19 = arith.constant 0 : index
      %23 = vector.load %arg5[%c0_17, %c0_18, %c0_19] : memref<1x1x24xf32, #tpu.memory_space<vmem>>, vector<1x1x24xf32>
      %24 = vector.shape_cast %23 : vector<1x1x24xf32> to vector<1x24xf32>
      %cst_20 = arith.constant 3.906250e-03 : f32
      %25 = vector.broadcast %cst_20 : f32 to vector<1x24xf32>
      %26 = arith.mulf %24, %25 : vector<1x24xf32>
      %c0_21 = arith.constant 0 : index
      %c0_22 = arith.constant 0 : index
      %c0_23 = arith.constant 0 : index
      %27 = vector.load %arg5[%c0_21, %c0_22, %c0_23] : memref<1x1x24xf32, #tpu.memory_space<vmem>>, vector<1x1x24xf32>
      %28 = vector.shape_cast %27 : vector<1x1x24xf32> to vector<1x24xf32>
      %29 = vector.shape_cast %26 : vector<1x24xf32> to vector<1x1x24xf32>
      tpu.vector_store %arg5[%c0_21, %c0_22, %c0_23], %29 {strides = array<i32>} : memref<1x1x24xf32, #tpu.memory_space<vmem>>, vector<1x1x24xf32>,
    } else {
    }
    return
  }
  func.func @transform_0(%arg0: i32, %arg1: i32) -> (i32, i32, i32) {
    %c0_i32 = arith.constant 0 : i32
    %c0_i32_0 = arith.constant 0 : i32
    return %arg0, %arg1, %c0_i32 : i32, i32, i32
  }
  func.func @transform_1(%arg0: i32, %arg1: i32) -> (i32, i32) {
    %c0_i32 = arith.constant 0 : i32
    %c0_i32_0 = arith.constant 0 : i32
    %c0_i32_1 = arith.constant 0 : i32
    return %c0_i32, %c0_i32_0 : i32, i32
  }
  func.func @transform_2(%arg0: i32, %arg1: i32) -> (i32, i32) {
    %c0_i32 = arith.constant 0 : i32
    %c0_i32_0 = arith.constant 0 : i32
    %c0_i32_1 = arith.constant 0 : i32
    return %c0_i32, %c0_i32_0 : i32, i32
  }
  func.func @transform_3(%arg0: i32, %arg1: i32) -> (i32, i32, i32) {
    %c0_i32 = arith.constant 0 : i32
    %c0_i32_0 = arith.constant 0 : i32
    %c0_i32_1 = arith.constant 0 : i32
    return %arg0, %c0_i32, %c0_i32_0 : i32, i32, i32
  }
}

</mosaic_0001>

<llo_original>
// kernel: tpu_custom_call.1
$region0: #{tpu_custom_call.1}
  #allocation0 [shape = 'u32[]', space=smem, size = 0x4, offset = 0x4, fixed_abs, tag = 'smem constant byte address 0x4 - core index']
  #allocation1 [shape = 'u32[72,128]{1,0:T(1,128)}', space=vmem, size = 0x9000, scoped, tag = 'internal scratch']
  %s0 = inlined_call_operand.vmem [shape: bf16[2,256,36], index: 0, kind: input, shape index: {}]
  %s1 = inlined_call_operand.vmem [shape: bf16[36,24], index: 1, kind: input, shape index: {}]
  %s2 = inlined_call_operand.vmem [shape: f32[1,24], index: 2, kind: input, shape index: {}]
  %s3 = inlined_call_operand.hbm [shape: f32[2,1,24], index: 3, kind: output, shape index: {}]
  %s4 = sld [smem:[#allocation0]]
  $region53: #{tpu_custom_call.1} parent=0
    _
  %s6 = ssub.s32 1, %s4
  %s7 = scalar_select 0, %s6, %s4
  $region1: #{tpu_custom_call.1} parent=0
    #allocation2 [shape = 'u8[1024]{0}', space=vmem, size = 0x400, scoped, tag = 'output window, operand 0']
    #allocation3 [shape = 's32[2]{0}', space=sflag, size = 0x8, scoped, tag = 'scoped memory for tpu_custom_call.1']
    %8 = vsyncpa [#allocation3], 0
    %s9 = scalar_lea.sflag [#allocation3], 1
    %10 = vsyncpa %s9, 0
    loop: start=0, step=1, limit=4
    $region2: #{tpu_custom_call.1} parent=1 // loop_pre_header
      _
    $region3: #{tpu_custom_call.1} parent=1 // loop_header
      %s12 = sphi 0, %s16
      %p13 = scmp.ge.s32.totalorder %s12, 4
      %s19 = sphi 0, %s31
      %s20 = sphi 0, %s27
      %s21 = sphi 0, %s19
      %s22 = sphi 0, %s20
      %s23 = sphi 0, %s21
      %s24 = sphi 0, %s22
      %s36 = sphi 0, %s38
      %s39 = sphi 0, %s36
      %s40 = sphi 0, %s39
      %s56 = sphi 0, %s40
      %s60 = sphi 0, %s60
      %s62 = sphi 0, %s60
      %s63 = sphi 0, %s62
      %s77 = sphi 0, %s63
      %s81 = sphi 0, %s81
      %s83 = sphi 0, %s81
      %s84 = sphi 0, %s83
      %s98 = sphi 0, %s84
      %s104 = sphi 0, %s106
      %s107 = sphi 0, %s104
      %s108 = sphi 0, %s107
      %s124 = sphi 0, %s108
    $region4: #{tpu_custom_call.1} parent=1 // loop_header_branch
      %15 = sbr.rel (%p13) target = $region8
    $region5: #{tpu_custom_call.1} parent=1 // loop_body
      %s17 = ssub.s32 %s12, 1
      %s18 = ssub.s32 %s12, 2
      %s25 = sadd.s32 1, %s20
      %p26 = scmp.ge.s32.totalorder %s25, 1
      %s27 = scalar_select %p26, 0, %s25
      %s28 = sadd.s32 1, %s19
      %s29 = scalar_select %p26, %s28, %s19
      %p30 = scmp.ge.s32.totalorder %s29, 2
      %s31 = scalar_select %p30, 0, %s29
      %s32 = ssub.s32 %s19, %s31
      %s33 = ssub.s32 %s20, %s27
      %s34 = sor.u32 %s32, %s33
      %p35 = scmp.eq.s32.totalorder %s34, 0
      %s37 = sadd.s32 %s36, 1
      %s38 = scalar_select %p35, %s36, %s37
      %p41 = pneg %p35
      %p42 = scmp.eq.s32.totalorder %s12, 1
      %p43 = por %p41, %p42
      %p44 = scmp.ne.s32.totalorder %s36, %s39
      %p45 = scmp.eq.s32.totalorder %s12, 0
      %p46 = por %p44, %p45
      %p47 = scmp.ne.s32.totalorder %s36, %s39
      %p48 = scmp.eq.s32.totalorder %s17, 1
      %p49 = por %p47, %p48
      %p50 = scmp.ne.s32.totalorder %s39, %s40
      %p51 = scmp.eq.s32.totalorder %s17, 0
      %p52 = por %p50, %p51
      %p53 = scmp.ne.s32.totalorder %s39, %s40
      %p54 = scmp.eq.s32.totalorder %s18, 1
      %p55 = por %p53, %p54
      %p57 = scmp.ne.s32.totalorder %s40, %s56
      %p58 = scmp.eq.s32.totalorder %s18, 0
      %p59 = por %p57, %p58
      %s61 = sadd.s32 %s60, 1
      %p64 = scmp.eq.s32.totalorder %s12, 1
      %p65 = scmp.ne.s32.totalorder %s60, %s62
      %p66 = scmp.eq.s32.totalorder %s12, 0
      %p67 = por %p65, %p66
      %p68 = scmp.ne.s32.totalorder %s60, %s62
      %p69 = scmp.eq.s32.totalorder %s17, 1
      %p70 = por %p68, %p69
      %p71 = scmp.ne.s32.totalorder %s62, %s63
      %p72 = scmp.eq.s32.totalorder %s17, 0
      %p73 = por %p71, %p72
      %p74 = scmp.ne.s32.totalorder %s62, %s63
      %p75 = scmp.eq.s32.totalorder %s18, 1
      %p76 = por %p74, %p75
      %p78 = scmp.ne.s32.totalorder %s63, %s77
      %p79 = scmp.eq.s32.totalorder %s18, 0
      %p80 = por %p78, %p79
      %s82 = sadd.s32 %s81, 1
      %p85 = scmp.eq.s32.totalorder %s12, 1
      %p86 = scmp.ne.s32.totalorder %s81, %s83
      %p87 = scmp.eq.s32.totalorder %s12, 0
      %p88 = por %p86, %p87
      %p89 = scmp.ne.s32.totalorder %s81, %s83
      %p90 = scmp.eq.s32.totalorder %s17, 1
      %p91 = por %p89, %p90
      %p92 = scmp.ne.s32.totalorder %s83, %s84
      %p93 = scmp.eq.s32.totalorder %s17, 0
      %p94 = por %p92, %p93
      %p95 = scmp.ne.s32.totalorder %s83, %s84
      %p96 = scmp.eq.s32.totalorder %s18, 1
      %p97 = por %p95, %p96
      %p99 = scmp.ne.s32.totalorder %s84, %s98
      %p100 = scmp.eq.s32.totalorder %s18, 0
      %p101 = por %p99, %p100
      %s102 = ssub.s32 %s19, %s31
      %p103 = scmp.eq.s32.totalorder %s102, 0
      %s105 = sadd.s32 %s104, 1
      %s106 = scalar_select %p103, %s104, %s105
      %p109 = pneg %p103
      %p110 = scmp.eq.s32.totalorder %s12, 1
      %p111 = por %p109, %p110
      %p112 = scmp.ne.s32.totalorder %s104, %s107
      %p113 = scmp.eq.s32.totalorder %s12, 0
      %p114 = por %p112, %p113
      %p115 = scmp.ne.s32.totalorder %s104, %s107
      %p116 = scmp.eq.s32.totalorder %s17, 1
      %p117 = por %p115, %p116
      %p118 = scmp.ne.s32.totalorder %s107, %s108
      %p119 = scmp.eq.s32.totalorder %s17, 0
      %p120 = por %p118, %p119
      %p121 = scmp.ne.s32.totalorder %s107, %s108
      %p122 = scmp.eq.s32.totalorder %s18, 1
      %p123 = por %p121, %p122
      %p125 = scmp.ne.s32.totalorder %s108, %s124
      %p126 = scmp.eq.s32.totalorder %s18, 0
      %p127 = por %p125, %p126
      %p128 = scmp.le.s32.totalorder 1, %s12
      %p129 = scmp.lt.s32.totalorder %s12, 3
      %p130 = pnand %p128, %p129
      %p131 = pneg %p130
      // Predicated region
      $region9: #{tpu_custom_call.1} parent=5 // pred_check
        _
      $region10: #{tpu_custom_call.1} parent=5 // pred_check_branch
        %133 = sbr.rel (%p130) target = $region12
      $region11: #{tpu_custom_call.1} parent=5 // pred_region
        %s134 = ssub.s32 %s12, 1
        // Predicated region
        $region13: #{tpu_custom_call.1} parent=11 // pred_check
          %p135 = pneg %p73
        $region14: #{tpu_custom_call.1} parent=11 // pred_check_branch
          %137 = sbr.rel (%p135) target = $region16
        $region15: #{tpu_custom_call.1} parent=11 // pred_region
          _
        $region16: #{tpu_custom_call.1} parent=11 // pred_fallthru
          _
        // Predicated region
        $region17: #{tpu_custom_call.1} parent=11 // pred_check
          %p138 = pneg %p94
        $region18: #{tpu_custom_call.1} parent=11 // pred_check_branch
          %140 = sbr.rel (%p138) target = $region20
        $region19: #{tpu_custom_call.1} parent=11 // pred_region
          _
        $region20: #{tpu_custom_call.1} parent=11 // pred_fallthru
          _
      $region12: #{tpu_custom_call.1} parent=5 // pred_fallthru
        _
      %p141 = scmp.lt.s32.totalorder %s12, 2
      // Predicated region
      $region21: #{tpu_custom_call.1} parent=5 // pred_check
        %p142 = pneg %p141
      $region22: #{tpu_custom_call.1} parent=5 // pred_check_branch
        %144 = sbr.rel (%p142) target = $region24
      $region23: #{tpu_custom_call.1} parent=5 // pred_region
        // Predicated region
        $region25: #{tpu_custom_call.1} parent=23 // pred_check
          %p145 = pneg %p46
        $region26: #{tpu_custom_call.1} parent=23 // pred_check_branch
          %147 = sbr.rel (%p145) target = $region28
        $region27: #{tpu_custom_call.1} parent=23 // pred_region
          %s148 = smul.u32 32, %s20
          %p149 = scmp.lt.s32.totalorder %s19, 1
          %s150 = scalar_select %p149, %s19, 1
          %p151 = scmp.lt.s32.totalorder %s148, 31
          %s152 = scalar_select %p151, %s148, 31
          %s153 = smul.addr %s150, 32
          %s154 = sadd.s32 %s152, %s153
          %s155 = smul.addr %s154, 4
          %s156 = scalar_lea.vmem %s0, %s155
          %s157 = smul.u32 32, %s20
        $region28: #{tpu_custom_call.1} parent=23 // pred_fallthru
          _
      $region24: #{tpu_custom_call.1} parent=5 // pred_fallthru
        _
      %p158 = scmp.le.s32.totalorder 1, %s12
      %p159 = scmp.lt.s32.totalorder %s12, 3
      %p160 = pnand %p158, %p159
      %p161 = pneg %p160
      // Predicated region
      $region29: #{tpu_custom_call.1} parent=5 // pred_check
        _
      $region30: #{tpu_custom_call.1} parent=5 // pred_check_branch
        %163 = sbr.rel (%p160) target = $region32
      $region31: #{tpu_custom_call.1} parent=5 // pred_region
        %s164 = ssub.s32 %s12, 1
        %s165 = smul.u32 32, %s22
        %p166 = scmp.lt.s32.totalorder %s21, 1
        %s167 = scalar_select %p166, %s21, 1
        %p168 = scmp.lt.s32.totalorder %s165, 31
        %s169 = scalar_select %p168, %s165, 31
        %s170 = smul.addr %s167, 32
        %s171 = sadd.s32 %s169, %s170
        %s172 = smul.addr %s171, 4
        %s173 = scalar_lea.vmem %s0, %s172
        %p174 = pneg %p52
        %p175 = pneg %p49
        %p176 = pneg %p73
        %p177 = pneg %p70
        %p178 = pneg %p94
        %p179 = pneg %p91
        %p180 = pneg %p120
        %p181 = pneg %p117
        %s182 = sand.u32 %s107, 1
        %s183 = scalar_lea.sflag [#allocation3], %s182
        %s184 = sand.u32 %s107, 1
        %s185 = scalar_lea.vmem [#allocation2], %s184
        %s186 = smul.u32 32, %s22
        %p187 = scmp.lt.s32.totalorder %s21, 1
        %s188 = scalar_select %p187, %s21, 1
        %p189 = scmp.lt.s32.totalorder %s186, 31
        %s190 = scalar_select %p189, %s186, 31
        %s191 = smul.addr %s188, 32
        %s192 = sadd.s32 %s190, %s191
        %s193 = smul.addr %s192, 4
        %s194 = scalar_lea.vmem %s0, %s193
        %s195 = smul.u32 32, %s22
        %p197 = scmp.eq.s32.totalorder %s22, 0
        // Predicated region
        $region33: #{tpu_custom_call.1} parent=31 // pred_check
          %p198 = pneg %p197
        $region34: #{tpu_custom_call.1} parent=31 // pred_check_branch
          %200 = sbr.rel (%p198) target = $region36
        $region35: #{tpu_custom_call.1} parent=31 // pred_region
          %vm201 = vcmask 188416
          %202 = vst.msk [vmem:[%s185] sm:$0x1] %vm201, 0.0
        $region36: #{tpu_custom_call.1} parent=31 // pred_fallthru
          _
        %v203 = vld [vmem:[%s194] sm:$0xf]
        %v204 = vld [vmem:[%s194 + $0x4] sm:$0xf]
        %v205 = vld [vmem:[%s194 + $0x8] sm:$0xf]
        %v206 = vld [vmem:[%s194 + $0xc] sm:$0xf]
        %v207 = vld [vmem:[%s194 + $0x10] sm:$0xf]
        %v208 = vld [vmem:[%s194 + $0x14] sm:$0xf]
        %v209 = vld [vmem:[%s194 + $0x18] sm:$0xf]
        %v210 = vld [vmem:[%s194 + $0x1c] sm:$0xf]
        %v211 = vld [vmem:[%s194 + $0x20] sm:$0xf]
        %v212 = vld [vmem:[%s194 + $0x24] sm:$0xf]
        %v213 = vld [vmem:[%s194 + $0x28] sm:$0xf]
        %v214 = vld [vmem:[%s194 + $0x2c] sm:$0xf]
        %v215 = vld [vmem:[%s194 + $0x30] sm:$0xf]
        %v216 = vld [vmem:[%s194 + $0x34] sm:$0xf]
        %v217 = vld [vmem:[%s194 + $0x38] sm:$0xf]
        %v218 = vld [vmem:[%s194 + $0x3c] sm:$0xf]
        %v219 = vld [vmem:[%s194 + $0x40] sm:$0xf]
        %v220 = vld [vmem:[%s194 + $0x44] sm:$0xf]
        %v221 = vld [vmem:[%s194 + $0x48] sm:$0xf]
        %v222 = vld [vmem:[%s194 + $0x4c] sm:$0xf]
        %v223 = vld [vmem:[%s194 + $0x50] sm:$0xf]
        %v224 = vld [vmem:[%s194 + $0x54] sm:$0xf]
        %v225 = vld [vmem:[%s194 + $0x58] sm:$0xf]
        %v226 = vld [vmem:[%s194 + $0x5c] sm:$0xf]
        %v227 = vld [vmem:[%s194 + $0x60] sm:$0xf]
        %v228 = vld [vmem:[%s194 + $0x64] sm:$0xf]
        %v229 = vld [vmem:[%s194 + $0x68] sm:$0xf]
        %v230 = vld [vmem:[%s194 + $0x6c] sm:$0xf]
        %v231 = vld [vmem:[%s194 + $0x70] sm:$0xf]
        %v232 = vld [vmem:[%s194 + $0x74] sm:$0xf]
        %v233 = vld [vmem:[%s194 + $0x78] sm:$0xf]
        %v234 = vld [vmem:[%s194 + $0x7c] sm:$0xf]
        %v235 = vld [vmem:[%s1] sm:$0xf]
        %v236 = vld [vmem:[%s1 + $0x4] sm:$0xf]
        %v237 = vld [vmem:[%s1 + $0x8] sm:$0xf]
        %v238 = vld [vmem:[%s1 + $0xc] sm:$0xf]
        %v239 = vld [vmem:[%s1 + $0x10] sm:$0x3]
        %v240 = vld [vmem:[%s2] sm:$0x1]
        %v242 = vperm.slane %v240, 0
        %v276 = vunpack.c.l.b16 %v203
        %v277 = vunpack.c.l.b16 %v204
        %v278 = vunpack.c.l.b16 %v205
        %v279 = vunpack.c.l.b16 %v206
        %v280 = vunpack.c.l.b16 %v207
        %v281 = vunpack.c.l.b16 %v208
        %v282 = vunpack.c.l.b16 %v209
        %v283 = vunpack.c.l.b16 %v210
        %v284 = vunpack.c.l.b16 %v211
        %v285 = vunpack.c.l.b16 %v212
        %v286 = vunpack.c.l.b16 %v213
        %v287 = vunpack.c.l.b16 %v214
        %v288 = vunpack.c.l.b16 %v215
        %v289 = vunpack.c.l.b16 %v216
        %v290 = vunpack.c.l.b16 %v217
        %v291 = vunpack.c.l.b16 %v218
        %v292 = vunpack.c.l.b16 %v219
        %v293 = vunpack.c.l.b16 %v220
        %v294 = vunpack.c.l.b16 %v221
        %v295 = vunpack.c.l.b16 %v222
        %v296 = vunpack.c.l.b16 %v223
        %v297 = vunpack.c.l.b16 %v224
        %v298 = vunpack.c.l.b16 %v225
        %v299 = vunpack.c.l.b16 %v226
        %v300 = vunpack.c.l.b16 %v227
        %v301 = vunpack.c.l.b16 %v228
        %v302 = vunpack.c.l.b16 %v229
        %v303 = vunpack.c.l.b16 %v230
        %v304 = vunpack.c.l.b16 %v231
        %v305 = vunpack.c.l.b16 %v232
        %v306 = vunpack.c.l.b16 %v233
        %v307 = vunpack.c.l.b16 %v234
        %v308 = vpack.c.b16 %v277, %v276
        %v309 = vpack.c.b16 %v279, %v278
        %v310 = vpack.c.b16 %v281, %v280
        %v311 = vpack.c.b16 %v283, %v282
        %v312 = vpack.c.b16 %v285, %v284
        %v313 = vpack.c.b16 %v287, %v286
        %v314 = vpack.c.b16 %v289, %v288
        %v315 = vpack.c.b16 %v291, %v290
        %v316 = vpack.c.b16 %v293, %v292
        %v317 = vpack.c.b16 %v295, %v294
        %v318 = vpack.c.b16 %v297, %v296
        %v319 = vpack.c.b16 %v299, %v298
        %v320 = vpack.c.b16 %v301, %v300
        %v321 = vpack.c.b16 %v303, %v302
        %v322 = vpack.c.b16 %v305, %v304
        %v323 = vpack.c.b16 %v307, %v306
        %v329 = vunpack.c.l.b16 %v235
        %v330 = vunpack.c.l.b16 %v236
        %v331 = vunpack.c.l.b16 %v237
        %v332 = vunpack.c.l.b16 %v238
        %v333 = vunpack.c.l.b16 %v239
        %v334 = vpack.c.b16 %v330, %v329
        %v335 = vpack.c.b16 %v332, %v331
        %v336 = vpack.c.b16 %v333, %v333
        %vm339 = vcmask 293888
        %v341 = vsel %vm339, %v308, 0
        %v344 = vsel %vm339, %v309, 0
        %v347 = vsel %vm339, %v310, 0
        %v350 = vsel %vm339, %v311, 0
        %v353 = vsel %vm339, %v312, 0
        %v356 = vsel %vm339, %v313, 0
        %v359 = vsel %vm339, %v314, 0
        %v362 = vsel %vm339, %v315, 0
        %v365 = vsel %vm339, %v316, 0
        %v368 = vsel %vm339, %v317, 0
        %v371 = vsel %vm339, %v318, 0
        %v374 = vsel %vm339, %v319, 0
        %v377 = vsel %vm339, %v320, 0
        %v380 = vsel %vm339, %v321, 0
        %v383 = vsel %vm339, %v322, 0
        %v386 = vsel %vm339, %v323, 0
        %vm388 = vcmask 1041408
        %v390 = vsel %vm388, %v336, 0
        %392 = vmatpush.bf16.msra.mxu0 0
        %393 = vmatpush.bf16.msra.mxu0 0
        %394 = vmatpush.bf16.msra.mxu0 0
        %395 = vmatpush.bf16.msra.mxu0 0
        %396 = vmatpush.bf16.msra.mxu0 0
        %397 = vmatpush.bf16.msra.mxu0 %v390
        %398 = vmatpush.bf16.msra.mxu0 %v335
        %399 = vmatpush.bf16.msra.mxu0 %v334
        %400 = vmatmul.bf16.gmra.mxu0 %v341
        %v401 = vpop.f32.mrf.mxu0
        %v402 = vadd.f32 %v242, %v401
        %v403 = vpop.f32.mrf.mxu0
        %v404 = vadd.f32 %v242, %v403
        %405 = vmatmul.bf16.gmra.mxu0 %v344
        %v406 = vpop.f32.mrf.mxu0
        %v407 = vadd.f32 %v242, %v406
        %v408 = vpop.f32.mrf.mxu0
        %v409 = vadd.f32 %v242, %v408
        %410 = vmatmul.bf16.gmra.mxu0 %v347
        %v411 = vpop.f32.mrf.mxu0
        %v412 = vadd.f32 %v242, %v411
        %v413 = vpop.f32.mrf.mxu0
        %v414 = vadd.f32 %v242, %v413
        %415 = vmatmul.bf16.gmra.mxu0 %v350
        %v416 = vpop.f32.mrf.mxu0
        %v417 = vadd.f32 %v242, %v416
        %v418 = vpop.f32.mrf.mxu0
        %v419 = vadd.f32 %v242, %v418
        %420 = vmatmul.bf16.gmra.mxu0 %v353
        %v421 = vpop.f32.mrf.mxu0
        %v422 = vadd.f32 %v242, %v421
        %v423 = vpop.f32.mrf.mxu0
        %v424 = vadd.f32 %v242, %v423
        %425 = vmatmul.bf16.gmra.mxu0 %v356
        %v426 = vpop.f32.mrf.mxu0
        %v427 = vadd.f32 %v242, %v426
        %v428 = vpop.f32.mrf.mxu0
        %v429 = vadd.f32 %v242, %v428
        %430 = vmatmul.bf16.gmra.mxu0 %v359
        %v431 = vpop.f32.mrf.mxu0
        %v432 = vadd.f32 %v242, %v431
        %v433 = vpop.f32.mrf.mxu0
        %v434 = vadd.f32 %v242, %v433
        %435 = vmatmul.bf16.gmra.mxu0 %v362
        %v436 = vpop.f32.mrf.mxu0
        %v437 = vadd.f32 %v242, %v436
        %v438 = vpop.f32.mrf.mxu0
        %v439 = vadd.f32 %v242, %v438
        %440 = vmatmul.bf16.gmra.mxu0 %v365
        %v441 = vpop.f32.mrf.mxu0
        %v442 = vadd.f32 %v242, %v441
        %v443 = vpop.f32.mrf.mxu0
        %v444 = vadd.f32 %v242, %v443
        %445 = vmatmul.bf16.gmra.mxu0 %v368
        %v446 = vpop.f32.mrf.mxu0
        %v447 = vadd.f32 %v242, %v446
        %v448 = vpop.f32.mrf.mxu0
        %v449 = vadd.f32 %v242, %v448
        %450 = vmatmul.bf16.gmra.mxu0 %v371
        %v451 = vpop.f32.mrf.mxu0
        %v452 = vadd.f32 %v242, %v451
        %v453 = vpop.f32.mrf.mxu0
        %v454 = vadd.f32 %v242, %v453
        %455 = vmatmul.bf16.gmra.mxu0 %v374
        %v456 = vpop.f32.mrf.mxu0
        %v457 = vadd.f32 %v242, %v456
        %v458 = vpop.f32.mrf.mxu0
        %v459 = vadd.f32 %v242, %v458
        %460 = vmatmul.bf16.gmra.mxu0 %v377
        %v461 = vpop.f32.mrf.mxu0
        %v462 = vadd.f32 %v242, %v461
        %v463 = vpop.f32.mrf.mxu0
        %v464 = vadd.f32 %v242, %v463
        %465 = vmatmul.bf16.gmra.mxu0 %v380
        %v466 = vpop.f32.mrf.mxu0
        %v467 = vadd.f32 %v242, %v466
        %v468 = vpop.f32.mrf.mxu0
        %v469 = vadd.f32 %v242, %v468
        %470 = vmatmul.bf16.gmra.mxu0 %v383
        %v471 = vpop.f32.mrf.mxu0
        %v472 = vadd.f32 %v242, %v471
        %v473 = vpop.f32.mrf.mxu0
        %v474 = vadd.f32 %v242, %v473
        %475 = vmatmul.bf16.gmra.mxu0 %v386
        %v476 = vpop.f32.mrf.mxu0
        %v477 = vadd.f32 %v242, %v476
        %v478 = vpop.f32.mrf.mxu0
        %v479 = vadd.f32 %v242, %v478
        %480 = vdwg.mxu0
        %v481 = vmax.f32 %v402, 0.0
        %v482 = vmax.f32 %v404, 0.0
        %v483 = vmax.f32 %v407, 0.0
        %v484 = vmax.f32 %v409, 0.0
        %v485 = vmax.f32 %v412, 0.0
        %v486 = vmax.f32 %v414, 0.0
        %v487 = vmax.f32 %v417, 0.0
        %v488 = vmax.f32 %v419, 0.0
        %v489 = vmax.f32 %v422, 0.0
        %v490 = vmax.f32 %v424, 0.0
        %v491 = vmax.f32 %v427, 0.0
        %v492 = vmax.f32 %v429, 0.0
        %v493 = vmax.f32 %v432, 0.0
        %v494 = vmax.f32 %v434, 0.0
        %v495 = vmax.f32 %v437, 0.0
        %v496 = vmax.f32 %v439, 0.0
        %v497 = vmax.f32 %v442, 0.0
        %v498 = vmax.f32 %v444, 0.0
        %v499 = vmax.f32 %v447, 0.0
        %v500 = vmax.f32 %v449, 0.0
        %v501 = vmax.f32 %v452, 0.0
        %v502 = vmax.f32 %v454, 0.0
        %v503 = vmax.f32 %v457, 0.0
        %v504 = vmax.f32 %v459, 0.0
        %v505 = vmax.f32 %v462, 0.0
        %v506 = vmax.f32 %v464, 0.0
        %v507 = vmax.f32 %v467, 0.0
        %v508 = vmax.f32 %v469, 0.0
        %v509 = vmax.f32 %v472, 0.0
        %v510 = vmax.f32 %v474, 0.0
        %v511 = vmax.f32 %v477, 0.0
        %v512 = vmax.f32 %v479, 0.0
        %v513 = vld [vmem:[%s185] sm:$0x1]
        %vm514 = vcmask 195584
        %v515 = vsel %vm514, %v481, 0.0
        %v516 = vsel %vm514, %v482, 0.0
        %v517 = vadd.f32 %v515, %v516
        %v518 = vsel %vm514, %v483, 0.0
        %v519 = vadd.f32 %v517, %v518
        %v520 = vsel %vm514, %v484, 0.0
        %v521 = vadd.f32 %v519, %v520
        %v522 = vsel %vm514, %v485, 0.0
        %v523 = vadd.f32 %v521, %v522
        %v524 = vsel %vm514, %v486, 0.0
        %v525 = vadd.f32 %v523, %v524
        %v526 = vsel %vm514, %v487, 0.0
        %v527 = vadd.f32 %v525, %v526
        %v528 = vsel %vm514, %v488, 0.0
        %v529 = vadd.f32 %v527, %v528
        %v530 = vsel %vm514, %v489, 0.0
        %v531 = vadd.f32 %v529, %v530
        %v532 = vsel %vm514, %v490, 0.0
        %v533 = vadd.f32 %v531, %v532
        %v534 = vsel %vm514, %v491, 0.0
        %v535 = vadd.f32 %v533, %v534
        %v536 = vsel %vm514, %v492, 0.0
        %v537 = vadd.f32 %v535, %v536
        %v538 = vsel %vm514, %v493, 0.0
        %v539 = vadd.f32 %v537, %v538
        %v540 = vsel %vm514, %v494, 0.0
        %v541 = vadd.f32 %v539, %v540
        %v542 = vsel %vm514, %v495, 0.0
        %v543 = vadd.f32 %v541, %v542
        %v544 = vsel %vm514, %v496, 0.0
        %v545 = vadd.f32 %v543, %v544
        %v546 = vsel %vm514, %v497, 0.0
        %v547 = vadd.f32 %v545, %v546
        %v548 = vsel %vm514, %v498, 0.0
        %v549 = vadd.f32 %v547, %v548
        %v550 = vsel %vm514, %v499, 0.0
        %v551 = vadd.f32 %v549, %v550
        %v552 = vsel %vm514, %v500, 0.0
        %v553 = vadd.f32 %v551, %v552
        %v554 = vsel %vm514, %v501, 0.0
        %v555 = vadd.f32 %v553, %v554
        %v556 = vsel %vm514, %v502, 0.0
        %v557 = vadd.f32 %v555, %v556
        %v558 = vsel %vm514, %v503, 0.0
        %v559 = vadd.f32 %v557, %v558
        %v560 = vsel %vm514, %v504, 0.0
        %v561 = vadd.f32 %v559, %v560
        %v562 = vsel %vm514, %v505, 0.0
        %v563 = vadd.f32 %v561, %v562
        %v564 = vsel %vm514, %v506, 0.0
        %v565 = vadd.f32 %v563, %v564
        %v566 = vsel %vm514, %v507, 0.0
        %v567 = vadd.f32 %v565, %v566
        %v568 = vsel %vm514, %v508, 0.0
        %v569 = vadd.f32 %v567, %v568
        %v570 = vsel %vm514, %v509, 0.0
        %v571 = vadd.f32 %v569, %v570
        %v572 = vsel %vm514, %v510, 0.0
        %v573 = vadd.f32 %v571, %v572
        %v574 = vsel %vm514, %v511, 0.0
        %v575 = vadd.f32 %v573, %v574
        %v576 = vsel %vm514, %v512, 0.0
        %v577 = vadd.f32 %v575, %v576
        %v578 = vrot.slane %v577, 4
        %v579 = vadd.f32 %v577, %v578
        %v580 = vrot.slane %v579, 2
        %v581 = vadd.f32 %v579, %v580
        %v582 = vrot.slane %v581, 1
        %v583 = vadd.f32 %v581, %v582
        %v584 = vadd.f32 %v513, %v583
        %vm585 = vcmask 188416
        %586 = vst.msk [vmem:[%s185] sm:$0x1] %vm585, %v584
        // Predicated region
        $region37: #{tpu_custom_call.1} parent=31 // pred_check
          %p587 = pneg %p197
        $region38: #{tpu_custom_call.1} parent=31 // pred_check_branch
          %589 = sbr.rel (%p587) target = $region40
        $region39: #{tpu_custom_call.1} parent=31 // pred_region
          %v590 = vld [vmem:[%s185] sm:$0x1]
          %v591 = vmul.f32 %v590, 0.00390625
          %592 = vst.msk [vmem:[%s185] sm:$0x1] %vm585, %v591
        $region40: #{tpu_custom_call.1} parent=31 // pred_fallthru
          _
        %s593 = sand.u32 %s107, 1
        %s594 = scalar_lea.sflag [#allocation3], %s593
        %s595 = sand.u32 %s107, 1
        %s596 = scalar_lea.vmem [#allocation2], %s595
        // Predicated region
        $region41: #{tpu_custom_call.1} parent=31 // pred_check
          %p597 = pneg %p117
        $region42: #{tpu_custom_call.1} parent=31 // pred_check_branch
          %599 = sbr.rel (%p597) target = $region44
        $region43: #{tpu_custom_call.1} parent=31 // pred_region
          %601 = vsyncadd %s594, 0
          %s602 = scalar_lea.hbm %s3, %s21
          %s604 = sshll.u32 %s596, 4
          %s605 = int_to_ptr.vmem [resolvable:$true] %s604
          %s606 = sshll.u32 %s602, 4
          %s607 = int_to_ptr.hbm [resolvable:$true] %s606
          %609 = dma.vmem_to_hbm [thread:$0]  %s605, 16, %s607, %s594
        $region44: #{tpu_custom_call.1} parent=31 // pred_fallthru
          _
      $region32: #{tpu_custom_call.1} parent=5 // pred_fallthru
        _
      %p610 = scmp.le.s32.totalorder 2, %s12
      // Predicated region
      $region45: #{tpu_custom_call.1} parent=5 // pred_check
        %p611 = pneg %p610
      $region46: #{tpu_custom_call.1} parent=5 // pred_check_branch
        %613 = sbr.rel (%p611) target = $region48
      $region47: #{tpu_custom_call.1} parent=5 // pred_region
        %s614 = ssub.s32 %s12, 2
        // Predicated region
        $region49: #{tpu_custom_call.1} parent=47 // pred_check
          %p615 = pneg %p123
        $region50: #{tpu_custom_call.1} parent=47 // pred_check_branch
          %617 = sbr.rel (%p615) target = $region52
        $region51: #{tpu_custom_call.1} parent=47 // pred_region
          %s618 = sand.u32 %s108, 1
          %s619 = scalar_lea.sflag [#allocation3], %s618
          %s620 = sand.u32 %s108, 1
          %s621 = scalar_lea.vmem [#allocation2], %s620
          %623 = dma.done %s619, 16
        $region52: #{tpu_custom_call.1} parent=47 // pred_fallthru
          _
      $region48: #{tpu_custom_call.1} parent=5 // pred_fallthru
        _
    $region6: #{tpu_custom_call.1} parent=1 // loop_footer
      %s16 = sadd.s32 1, %s12
    $region7: #{tpu_custom_call.1} parent=1 // loop_footer_branch
      %11 = sbr.rel target = $region3
    $region8: #{tpu_custom_call.1} parent=1 // loop_exit
      _
    %624 = vsyncpa [#allocation3], 1
    %s625 = scalar_lea.sflag [#allocation3], 1
    %626 = vsyncpa %s625, 1

</llo_original>
